<compile_context>
chip_gen: v7x
topology: tpu7x:2x2x1
jax: 0.10.0
libtpu: 0.0.40
codegen_flags: <defaults>
</compile_context>

<pallas_src>
import functools

import jax
import jax.numpy as jnp
from jax.experimental import pallas as pl
from jax.experimental.pallas import tpu as pltpu


def _downblock_kernel(x_ref, w_ref, shift_ref, o_ref, *, c_in, w_out, m):
    # x_ref:     (6, C_in, L)   parity/column-phase planes, L = (H_out+1)*W_out
    # w_ref:     (co_blk, 9*C_in)  BN-scale-folded conv weight
    # shift_ref: (co_blk, 1)       BN shift (beta - mean*scale), f32
    # o_ref:     (co_blk, M)       output tile (NCHW-ordered, M = H_out*W_out)
    acc = None
    for kh in range(3):
        rp, dh = kh & 1, kh >> 1
        for kw in range(3):
            p = rp * 3 + kw
            t = kh * 3 + kw
            # Contiguous lane window of the plane: the in-kernel im2col tap.
            # Static (possibly lane-unaligned) start -> cheap shifted VMEM load.
            rhs = x_ref[p, :, pl.ds(dh * w_out, m)]            # (C_in, M)
            lhs = w_ref[:, t * c_in:(t + 1) * c_in]            # (co_blk, C_in)
            d = jnp.dot(lhs, rhs, preferred_element_type=jnp.float32)
            acc = d if acc is None else acc + d
    y = acc + shift_ref[...]
    # ELU(alpha=1).  The select discards the exp branch for y > 0, so no clamp
    # is needed.  NOTE: for a ragged last C_out block the padded rows carry
    # garbage; it never crosses rows/lanes and is dropped by the masked store.
    y = jnp.where(y > 0, y, jnp.exp(y) - 1.0)
    o_ref[...] = y.astype(o_ref.dtype)


def _vmem_capacity_bytes():
    try:
        return int(pltpu.get_tpu_info().vmem_capacity_bytes)
    except Exception:
        return 64 * 1024 * 1024  # v7x-safe fallback


@functools.partial(jax.jit, static_argnames=("compute_dtype",))
def downblock_forward(x, weight, gamma, beta, running_mean, running_var,
                      eps=1e-5, *, compute_dtype=jnp.bfloat16):
    """DownBlock forward: Conv2d(k=3, s=2, p=1, no bias) -> BatchNorm(eval) -> ELU.

    x:      [N, C_in, H, W]        (NCHW, like PyTorch)
    weight: [C_out, C_in, 3, 3]    (OIHW)
    gamma, beta, running_mean, running_var: [C_out]
    returns [N, C_out, H_out, W_out] with H_out = (H-1)//2 + 1 (same for W).
    """
    N, C_in, H, W = x.shape
    C_out = weight.shape[0]
    H_out = (H - 1) // 2 + 1
    W_out = (W - 1) // 2 + 1
    M = H_out * W_out
    L = (H_out + 1) * W_out
    K = 9 * C_in
    cdt = jnp.dtype(compute_dtype) if compute_dtype is not None else jnp.dtype(x.dtype)

    # ---- glue: pad + row-parity / column-phase split (pure layout, ~1x of x).
    # planes[p = rp*3 + kw][n, ci, i, wo] = x_pad[n, ci, 2*i + rp, 2*wo + kw]
    # so conv tap (kh, kw) is rows [dh, dh+H_out) of plane (kh&1)*3 + kw, i.e.
    # the contiguous flat window [dh*W_out, dh*W_out + M).  No 2.25x im2col.
    x_pad = jnp.pad(x, ((0, 0), (0, 0), (1, 2 * H_out - H), (1, 2 * W_out - W)))
    x_pad = x_pad.astype(cdt)
    planes = []
    for rp in range(2):
        rows = x_pad[:, :, rp::2, :]
        pad_rows = (H_out + 1) - rows.shape[2]
        if pad_rows:
            rows = jnp.pad(rows, ((0, 0), (0, 0), (0, pad_rows), (0, 0)))
        for kw in range(3):
            planes.append(rows[:, :, :, kw:kw + 2 * W_out - 1:2])
    x6 = jnp.stack(planes, axis=1).reshape(N, 6, C_in, L)

    # ---- fold BatchNorm (eval) into the conv weight + a per-channel shift ----
    scale = gamma * jax.lax.rsqrt(running_var + eps)                  # [C_out]
    shift = beta - running_mean * scale                               # [C_out]
    w_flat = jnp.transpose(weight, (0, 2, 3, 1)).reshape(C_out, K)    # [C_out, 9*C_in]
    w_flat = (w_flat * scale[:, None]).astype(cdt)
    shift_col = shift.reshape(C_out, 1).astype(jnp.float32)

    # ---- VMEM-budget-aware C_out tiling (v7x: 64 MiB; v5e/v6e: 128 MiB) ----
    vmem_cap = _vmem_capacity_bytes()
    vmem_limit = int(vmem_cap * 0.75)
    in_b = cdt.itemsize
    out_b = jnp.dtype(x.dtype).itemsize
    x_blk_bytes = 2 * 6 * C_in * L * in_b          # double-buffered input block

    def _usage(cb):
        return (x_blk_bytes + 2 * cb * K * in_b + 2 * cb * 4 + 2 * cb * M * out_b)

    if C_out % 8 == 0:
        co_blk = C_out
        while co_blk > 8 and _usage(co_blk) > int(vmem_limit * 0.9):
            co_blk -= 8
        if N == 1 and C_out >= 16:      # keep both v7x TensorCores busy
            co_blk = min(co_blk, ((C_out // 2 + 7) // 8) * 8)
    else:
        co_blk = C_out                  # full dim is always a legal block
    n_co = pl.cdiv(C_out, co_blk)

    kern = functools.partial(_downblock_kernel, c_in=C_in, w_out=W_out, m=M)
    out_flat = pl.pallas_call(
        kern,
        out_shape=jax.ShapeDtypeStruct((N, C_out, M), x.dtype),
        grid_spec=pltpu.PrefetchScalarGridSpec(
            num_scalar_prefetch=0,
            grid=(N, n_co),
            in_specs=[
                # full spatial extent per image; constant along the co axis so
                # it is fetched once per image, not once per C_out block.
                pl.BlockSpec((None, 6, C_in, L), lambda n, co: (n, 0, 0, 0)),
                pl.BlockSpec((co_blk, K), lambda n, co: (co, 0)),
                pl.BlockSpec((co_blk, 1), lambda n, co: (co, 0)),
            ],
            out_specs=pl.BlockSpec((None, co_blk, M), lambda n, co: (n, co, 0)),
        ),
        compiler_params=pltpu.CompilerParams(
            dimension_semantics=("parallel", "parallel"),
            vmem_limit_bytes=vmem_limit,
        ),
    )(x6, w_flat, shift_col)

    # pure reshape (no transpose): output is already NCHW-ordered
    return out_flat.reshape(N, C_out, H_out, W_out)


def _reference_downblock(x, weight, gamma, beta, running_mean, running_var, eps=1e-5):
    """Pure-JAX reference: Conv2d(k=3, s=2, p=1, no bias) -> BN(eval) -> ELU."""
    y = jax.lax.conv_general_dilated(
        x, weight, window_strides=(2, 2), padding=((1, 1), (1, 1)),
        dimension_numbers=("NCHW", "OIHW", "NCHW"))
    scale = gamma * jax.lax.rsqrt(running_var + eps)
    shift = beta - running_mean * scale
    y = y * scale[None, :, None, None] + shift[None, :, None, None]
    return jnp.where(y > 0, y, jnp.expm1(y))


if __name__ == "__main__":
    key = jax.random.PRNGKey(0)
    k_x, k_w, k_g, k_b, k_m, k_v, k_x2, k_w2 = jax.random.split(key, 8)

    # small shapes consistent with the module
    N, C_in, C_out, H, W = 2, 4, 8, 16, 16
    x = jax.random.normal(k_x, (N, C_in, H, W), dtype=jnp.float32)
    weight = jax.random.normal(k_w, (C_out, C_in, 3, 3), dtype=jnp.float32) * 0.1
    gamma = 1.0 + 0.1 * jax.random.normal(k_g, (C_out,), dtype=jnp.float32)
    beta = 0.1 * jax.random.normal(k_b, (C_out,), dtype=jnp.float32)
    running_mean = 0.1 * jax.random.normal(k_m, (C_out,), dtype=jnp.float32)
    running_var = jnp.abs(jax.random.normal(k_v, (C_out,), dtype=jnp.float32)) + 0.5

    ref = _reference_downblock(x, weight, gamma, beta, running_mean, running_var)

    # default path: bf16 operands, f32 accumulation + epilogue
    out_bf16 = jax.block_until_ready(
        downblock_forward(x, weight, gamma, beta, running_mean, running_var))
    assert out_bf16.shape == (N, C_out, H // 2, W // 2), out_bf16.shape
    assert jnp.allclose(out_bf16, ref, atol=5e-2, rtol=5e-2), "bf16 path mismatch"

    # f32 path: tight numerics check
    out_f32 = jax.block_until_ready(
        downblock_forward(x, weight, gamma, beta, running_mean, running_var,
                          compute_dtype=jnp.float32))
    assert jnp.allclose(out_f32, ref, atol=1e-4, rtol=1e-3), "f32 path mismatch"

    # N=1 / odd spatial / multi-C_out-block path (exercises padding math and
    # the batch==1 two-grid-step rule), f32 numerics.
    N2, Ci2, Co2, H2, W2 = 1, 3, 16, 15, 13
    x2 = jax.random.normal(k_x2, (N2, Ci2, H2, W2), dtype=jnp.float32)
    w2 = jax.random.normal(k_w2, (Co2, Ci2, 3, 3), dtype=jnp.float32) * 0.1
    g2 = jnp.ones((Co2,), jnp.float32)
    b2 = jnp.zeros((Co2,), jnp.float32)
    m2 = jnp.zeros((Co2,), jnp.float32)
    v2 = jnp.ones((Co2,), jnp.float32)
    out2 = jax.block_until_ready(
        downblock_forward(x2, w2, g2, b2, m2, v2, compute_dtype=jnp.float32))
    ref2 = _reference_downblock(x2, w2, g2, b2, m2, v2)
    assert out2.shape == (N2, Co2, 8, 7), out2.shape
    assert jnp.allclose(out2, ref2, atol=1e-4, rtol=1e-3), "odd-size path mismatch"

    print("KERNEL_OK")
</pallas_src>

<mosaic_0001>
module attributes {stable_mosaic.version = 11 : i64} {
  func.func @_downblock_kernel(%arg0: i32, %arg1: i32, %arg2: memref<1x6x4x72xbf16, #tpu.memory_space<vmem>>, %arg3: memref<8x36xbf16, #tpu.memory_space<vmem>>, %arg4: memref<8x1xf32, #tpu.memory_space<vmem>>, %arg5: memref<1x8x64xf32, #tpu.memory_space<vmem>>) attributes {dimension_semantics = [#tpu.dimension_semantics<parallel>, #tpu.dimension_semantics<parallel>], iteration_bounds = array<i64: 2, 1>, scalar_prefetch = 0 : i64, scratch_operands = 0 : i64, tpu.core_type = #tpu.core_type<tc>, window_params = [{transform_indices = @transform_0, window_bounds = array<i64: 1, 6, 4, 72>}, {transform_indices = @transform_1, window_bounds = array<i64: 8, 36>}, {transform_indices = @transform_2, window_bounds = array<i64: 8, 1>}, {transform_indices = @transform_3, window_bounds = array<i64: 1, 8, 64>}]} {
    %c0 = arith.constant 0 : index
    %c0_0 = arith.constant 0 : index
    %c0_1 = arith.constant 0 : index
    %c0_2 = arith.constant 0 : index
    %0 = vector.load %arg2[%c0, %c0_0, %c0_1, %c0_2] : memref<1x6x4x72xbf16, #tpu.memory_space<vmem>>, vector<1x1x4x64xbf16>
    %1 = vector.shape_cast %0 : vector<1x1x4x64xbf16> to vector<4x64xbf16>
    %c0_3 = arith.constant 0 : index
    %c0_4 = arith.constant 0 : index
    %2 = vector.load %arg3[%c0_3, %c0_4] : memref<8x36xbf16, #tpu.memory_space<vmem>>, vector<8x4xbf16>
    %cst = arith.constant dense<0.000000e+00> : vector<8x64xf32>
    %3 = tpu.matmul %2, %1, %cst {dimension_numbers = #tpu.dot_dimension_numbers<[1], [0], [0], [1], [0, 0, 1, 1], [], []>} : vector<8x4xbf16>, vector<4x64xbf16>, vector<8x64xf32> -> vector<8x64xf32>
    %c0_5 = arith.constant 0 : index
    %c1 = arith.constant 1 : index
    %c0_6 = arith.constant 0 : index
    %c0_7 = arith.constant 0 : index
    %4 = vector.load %arg2[%c0_5, %c1, %c0_6, %c0_7] : memref<1x6x4x72xbf16, #tpu.memory_space<vmem>>, vector<1x1x4x64xbf16>
    %5 = vector.shape_cast %4 : vector<1x1x4x64xbf16> to vector<4x64xbf16>
    %c0_8 = arith.constant 0 : index
    %c4 = arith.constant 4 : index
    %6 = vector.load %arg3[%c0_8, %c4] : memref<8x36xbf16, #tpu.memory_space<vmem>>, vector<8x4xbf16>
    %cst_9 = arith.constant dense<0.000000e+00> : vector<8x64xf32>
    %7 = tpu.matmul %6, %5, %cst_9 {dimension_numbers = #tpu.dot_dimension_numbers<[1], [0], [0], [1], [0, 0, 1, 1], [], []>} : vector<8x4xbf16>, vector<4x64xbf16>, vector<8x64xf32> -> vector<8x64xf32>
    %8 = arith.addf %3, %7 : vector<8x64xf32>
    %c0_10 = arith.constant 0 : index
    %c2 = arith.constant 2 : index
    %c0_11 = arith.constant 0 : index
    %c0_12 = arith.constant 0 : index
    %9 = vector.load %arg2[%c0_10, %c2, %c0_11, %c0_12] : memref<1x6x4x72xbf16, #tpu.memory_space<vmem>>, vector<1x1x4x64xbf16>
    %10 = vector.shape_cast %9 : vector<1x1x4x64xbf16> to vector<4x64xbf16>
    %c0_13 = arith.constant 0 : index
    %c8 = arith.constant 8 : index
    %11 = vector.load %arg3[%c0_13, %c8] : memref<8x36xbf16, #tpu.memory_space<vmem>>, vector<8x4xbf16>
    %cst_14 = arith.constant dense<0.000000e+00> : vector<8x64xf32>
    %12 = tpu.matmul %11, %10, %cst_14 {dimension_numbers = #tpu.dot_dimension_numbers<[1], [0], [0], [1], [0, 0, 1, 1], [], []>} : vector<8x4xbf16>, vector<4x64xbf16>, vector<8x64xf32> -> vector<8x64xf32>
    %13 = arith.addf %8, %12 : vector<8x64xf32>
    %c0_15 = arith.constant 0 : index
    %c3 = arith.constant 3 : index
    %c0_16 = arith.constant 0 : index
    %c0_17 = arith.constant 0 : index
    %14 = vector.load %arg2[%c0_15, %c3, %c0_16, %c0_17] : memref<1x6x4x72xbf16, #tpu.memory_space<vmem>>, vector<1x1x4x64xbf16>
    %15 = vector.shape_cast %14 : vector<1x1x4x64xbf16> to vector<4x64xbf16>
    %c0_18 = arith.constant 0 : index
    %c12 = arith.constant 12 : index
    %16 = vector.load %arg3[%c0_18, %c12] : memref<8x36xbf16, #tpu.memory_space<vmem>>, vector<8x4xbf16>
    %cst_19 = arith.constant dense<0.000000e+00> : vector<8x64xf32>
    %17 = tpu.matmul %16, %15, %cst_19 {dimension_numbers = #tpu.dot_dimension_numbers<[1], [0], [0], [1], [0, 0, 1, 1], [], []>} : vector<8x4xbf16>, vector<4x64xbf16>, vector<8x64xf32> -> vector<8x64xf32>
    %18 = arith.addf %13, %17 : vector<8x64xf32>
    %c0_20 = arith.constant 0 : index
    %c4_21 = arith.constant 4 : index
    %c0_22 = arith.constant 0 : index
    %c0_23 = arith.constant 0 : index
    %19 = vector.load %arg2[%c0_20, %c4_21, %c0_22, %c0_23] : memref<1x6x4x72xbf16, #tpu.memory_space<vmem>>, vector<1x1x4x64xbf16>
    %20 = vector.shape_cast %19 : vector<1x1x4x64xbf16> to vector<4x64xbf16>
    %c0_24 = arith.constant 0 : index
    %c16 = arith.constant 16 : index
    %21 = vector.load %arg3[%c0_24, %c16] : memref<8x36xbf16, #tpu.memory_space<vmem>>, vector<8x4xbf16>
    %cst_25 = arith.constant dense<0.000000e+00> : vector<8x64xf32>
    %22 = tpu.matmul %21, %20, %cst_25 {dimension_numbers = #tpu.dot_dimension_numbers<[1], [0], [0], [1], [0, 0, 1, 1], [], []>} : vector<8x4xbf16>, vector<4x64xbf16>, vector<8x64xf32> -> vector<8x64xf32>
    %23 = arith.addf %18, %22 : vector<8x64xf32>
    %c0_26 = arith.constant 0 : index
    %c5 = arith.constant 5 : index
    %c0_27 = arith.constant 0 : index
    %c0_28 = arith.constant 0 : index
    %24 = vector.load %arg2[%c0_26, %c5, %c0_27, %c0_28] : memref<1x6x4x72xbf16, #tpu.memory_space<vmem>>, vector<1x1x4x64xbf16>
    %25 = vector.shape_cast %24 : vector<1x1x4x64xbf16> to vector<4x64xbf16>
    %c0_29 = arith.constant 0 : index
    %c20 = arith.constant 20 : index
    %26 = vector.load %arg3[%c0_29, %c20] : memref<8x36xbf16, #tpu.memory_space<vmem>>, vector<8x4xbf16>
    %cst_30 = arith.constant dense<0.000000e+00> : vector<8x64xf32>
    %27 = tpu.matmul %26, %25, %cst_30 {dimension_numbers = #tpu.dot_dimension_numbers<[1], [0], [0], [1], [0, 0, 1, 1], [], []>} : vector<8x4xbf16>, vector<4x64xbf16>, vector<8x64xf32> -> vector<8x64xf32>
    %28 = arith.addf %23, %27 : vector<8x64xf32>
    %c0_31 = arith.constant 0 : index
    %c0_32 = arith.constant 0 : index
    %c0_33 = arith.constant 0 : index
    %c8_34 = arith.constant 8 : index
    %29 = vector.load %arg2[%c0_31, %c0_32, %c0_33, %c8_34] : memref<1x6x4x72xbf16, #tpu.memory_space<vmem>>, vector<1x1x4x64xbf16>
    %30 = vector.shape_cast %29 : vector<1x1x4x64xbf16> to vector<4x64xbf16>
    %c0_35 = arith.constant 0 : index
    %c24 = arith.constant 24 : index
    %31 = vector.load %arg3[%c0_35, %c24] : memref<8x36xbf16, #tpu.memory_space<vmem>>, vector<8x4xbf16>
    %cst_36 = arith.constant dense<0.000000e+00> : vector<8x64xf32>
    %32 = tpu.matmul %31, %30, %cst_36 {dimension_numbers = #tpu.dot_dimension_numbers<[1], [0], [0], [1], [0, 0, 1, 1], [], []>} : vector<8x4xbf16>, vector<4x64xbf16>, vector<8x64xf32> -> vector<8x64xf32>
    %33 = arith.addf %28, %32 : vector<8x64xf32>
    %c0_37 = arith.constant 0 : index
    %c1_38 = arith.constant 1 : index
    %c0_39 = arith.constant 0 : index
    %c8_40 = arith.constant 8 : index
    %34 = vector.load %arg2[%c0_37, %c1_38, %c0_39, %c8_40] : memref<1x6x4x72xbf16, #tpu.memory_space<vmem>>, vector<1x1x4x64xbf16>
    %35 = vector.shape_cast %34 : vector<1x1x4x64xbf16> to vector<4x64xbf16>
    %c0_41 = arith.constant 0 : index
    %c28 = arith.constant 28 : index
    %36 = vector.load %arg3[%c0_41, %c28] : memref<8x36xbf16, #tpu.memory_space<vmem>>, vector<8x4xbf16>
    %cst_42 = arith.constant dense<0.000000e+00> : vector<8x64xf32>
    %37 = tpu.matmul %36, %35, %cst_42 {dimension_numbers = #tpu.dot_dimension_numbers<[1], [0], [0], [1], [0, 0, 1, 1], [], []>} : vector<8x4xbf16>, vector<4x64xbf16>, vector<8x64xf32> -> vector<8x64xf32>
    %38 = arith.addf %33, %37 : vector<8x64xf32>
    %c0_43 = arith.constant 0 : index
    %c2_44 = arith.constant 2 : index
    %c0_45 = arith.constant 0 : index
    %c8_46 = arith.constant 8 : index
    %39 = vector.load %arg2[%c0_43, %c2_44, %c0_45, %c8_46] : memref<1x6x4x72xbf16, #tpu.memory_space<vmem>>, vector<1x1x4x64xbf16>
    %40 = vector.shape_cast %39 : vector<1x1x4x64xbf16> to vector<4x64xbf16>
    %c0_47 = arith.constant 0 : index
    %c32 = arith.constant 32 : index
    %41 = vector.load %arg3[%c0_47, %c32] : memref<8x36xbf16, #tpu.memory_space<vmem>>, vector<8x4xbf16>
    %cst_48 = arith.constant dense<0.000000e+00> : vector<8x64xf32>
    %42 = tpu.matmul %41, %40, %cst_48 {dimension_numbers = #tpu.dot_dimension_numbers<[1], [0], [0], [1], [0, 0, 1, 1], [], []>} : vector<8x4xbf16>, vector<4x64xbf16>, vector<8x64xf32> -> vector<8x64xf32>
    %43 = arith.addf %38, %42 : vector<8x64xf32>
    %c0_49 = arith.constant 0 : index
    %c0_50 = arith.constant 0 : index
    %44 = vector.load %arg4[%c0_49, %c0_50] : memref<8x1xf32, #tpu.memory_space<vmem>>, vector<8x1xf32>
    %45 = vector.broadcast %44 : vector<8x1xf32> to vector<8x64xf32>
    %46 = arith.addf %43, %45 : vector<8x64xf32>
    %cst_51 = arith.constant 0.000000e+00 : f32
    %47 = vector.broadcast %cst_51 : f32 to vector<8x64xf32>
    %48 = arith.cmpf ogt, %46, %47 : vector<8x64xf32>
    %49 = math.exp %46 : vector<8x64xf32>
    %cst_52 = arith.constant 1.000000e+00 : f32
    %50 = vector.broadcast %cst_52 : f32 to vector<8x64xf32>
    %51 = arith.subf %49, %50 : vector<8x64xf32>
    %52 = arith.select %48, %46, %51 : vector<8x64xi1>, vector<8x64xf32>
    %c0_53 = arith.constant 0 : index
    %c0_54 = arith.constant 0 : index
    %c0_55 = arith.constant 0 : index
    %53 = vector.load %arg5[%c0_53, %c0_54, %c0_55] : memref<1x8x64xf32, #tpu.memory_space<vmem>>, vector<1x8x64xf32>
    %54 = vector.shape_cast %53 : vector<1x8x64xf32> to vector<8x64xf32>
    %55 = vector.shape_cast %52 : vector<8x64xf32> to vector<1x8x64xf32>
    tpu.vector_store %arg5[%c0_53, %c0_54, %c0_55], %55 {strides = array<i32>} : memref<1x8x64xf32, #tpu.memory_space<vmem>>, vector<1x8x64xf32>,
    return
  }
  func.func @transform_0(%arg0: i32, %arg1: i32) -> (i32, i32, i32, i32) {
    %c0_i32 = arith.constant 0 : i32
    %c0_i32_0 = arith.constant 0 : i32
    %c0_i32_1 = arith.constant 0 : i32
    %c0_i32_2 = arith.constant 0 : i32
    return %arg0, %c0_i32, %c0_i32_0, %c0_i32_1 : i32, i32, i32, i32
  }
  func.func @transform_1(%arg0: i32, %arg1: i32) -> (i32, i32) {
    %c0_i32 = arith.constant 0 : i32
    %c0_i32_0 = arith.constant 0 : i32
    return %arg1, %c0_i32 : i32, i32
  }
  func.func @transform_2(%arg0: i32, %arg1: i32) -> (i32, i32) {
    %c0_i32 = arith.constant 0 : i32
    %c0_i32_0 = arith.constant 0 : i32
    return %arg1, %c0_i32 : i32, i32
  }
  func.func @transform_3(%arg0: i32, %arg1: i32) -> (i32, i32, i32) {
    %c0_i32 = arith.constant 0 : i32
    %c0_i32_0 = arith.constant 0 : i32
    return %arg0, %arg1, %c0_i32 : i32, i32, i32
  }
}

</mosaic_0001>

<llo_original>
// kernel: downblock_forward.1
$region0: #{downblock_forward.1}
  #allocation0 [shape = 'u32[]', space=smem, size = 0x4, offset = 0x4, fixed_abs, tag = 'smem constant byte address 0x4 - core index']
  #allocation1 [shape = 'u32[144,128]{1,0:T(1,128)}', space=vmem, size = 0x12000, scoped, tag = 'internal scratch']
  %s0 = inlined_call_operand.vmem [shape: bf16[2,6,4,72], index: 0, kind: input, shape index: {}]
  %s1 = inlined_call_operand.vmem [shape: bf16[8,36], index: 1, kind: input, shape index: {}]
  %s2 = inlined_call_operand.vmem [shape: f32[8,1], index: 2, kind: input, shape index: {}]
  %s3 = inlined_call_operand.vmem [shape: f32[2,8,64], index: 3, kind: output, shape index: {}]
  %s4 = sld [smem:[#allocation0]]
  $region45: #{downblock_forward.1} parent=0
    _
  %s6 = ssub.s32 1, %s4
  %s7 = scalar_select 0, %s6, %s4
  loop: start=0, step=1, limit=4
  $region2: #{downblock_forward.1} parent=0 // loop_pre_header
    _
  $region3: #{downblock_forward.1} parent=0 // loop_header
    %s9 = sphi 0, %s13
    %p10 = scmp.ge.s32.totalorder %s9, 4
    %s16 = sphi 0, %s28
    %s17 = sphi 0, %s24
    %s18 = sphi 0, %s16
    %s19 = sphi 0, %s17
    %s20 = sphi 0, %s18
    %s21 = sphi 0, %s19
    %s31 = sphi 0, %s33
    %s34 = sphi 0, %s31
    %s35 = sphi 0, %s34
    %s51 = sphi 0, %s35
    %s57 = sphi 0, %s59
    %s60 = sphi 0, %s57
    %s61 = sphi 0, %s60
    %s77 = sphi 0, %s61
    %s83 = sphi 0, %s85
    %s86 = sphi 0, %s83
    %s87 = sphi 0, %s86
    %s103 = sphi 0, %s87
    %s111 = sphi 0, %s113
    %s114 = sphi 0, %s111
    %s115 = sphi 0, %s114
    %s131 = sphi 0, %s115
  $region4: #{downblock_forward.1} parent=0 // loop_header_branch
    %12 = sbr.rel (%p10) target = $region8
  $region5: #{downblock_forward.1} parent=0 // loop_body
    %s14 = ssub.s32 %s9, 1
    %s15 = ssub.s32 %s9, 2
    %s22 = sadd.s32 1, %s17
    %p23 = scmp.ge.s32.totalorder %s22, 1
    %s24 = scalar_select %p23, 0, %s22
    %s25 = sadd.s32 1, %s16
    %s26 = scalar_select %p23, %s25, %s16
    %p27 = scmp.ge.s32.totalorder %s26, 2
    %s28 = scalar_select %p27, 0, %s26
    %s29 = ssub.s32 %s16, %s28
    %p30 = scmp.eq.s32.totalorder %s29, 0
    %s32 = sadd.s32 %s31, 1
    %s33 = scalar_select %p30, %s31, %s32
    %p36 = pneg %p30
    %p37 = scmp.eq.s32.totalorder %s9, 1
    %p38 = por %p36, %p37
    %p39 = scmp.ne.s32.totalorder %s31, %s34
    %p40 = scmp.eq.s32.totalorder %s9, 0
    %p41 = por %p39, %p40
    %p42 = scmp.ne.s32.totalorder %s31, %s34
    %p43 = scmp.eq.s32.totalorder %s14, 1
    %p44 = por %p42, %p43
    %p45 = scmp.ne.s32.totalorder %s34, %s35
    %p46 = scmp.eq.s32.totalorder %s14, 0
    %p47 = por %p45, %p46
    %p48 = scmp.ne.s32.totalorder %s34, %s35
    %p49 = scmp.eq.s32.totalorder %s15, 1
    %p50 = por %p48, %p49
    %p52 = scmp.ne.s32.totalorder %s35, %s51
    %p53 = scmp.eq.s32.totalorder %s15, 0
    %p54 = por %p52, %p53
    %s55 = ssub.s32 %s17, %s24
    %p56 = scmp.eq.s32.totalorder %s55, 0
    %s58 = sadd.s32 %s57, 1
    %s59 = scalar_select %p56, %s57, %s58
    %p62 = pneg %p56
    %p63 = scmp.eq.s32.totalorder %s9, 1
    %p64 = por %p62, %p63
    %p65 = scmp.ne.s32.totalorder %s57, %s60
    %p66 = scmp.eq.s32.totalorder %s9, 0
    %p67 = por %p65, %p66
    %p68 = scmp.ne.s32.totalorder %s57, %s60
    %p69 = scmp.eq.s32.totalorder %s14, 1
    %p70 = por %p68, %p69
    %p71 = scmp.ne.s32.totalorder %s60, %s61
    %p72 = scmp.eq.s32.totalorder %s14, 0
    %p73 = por %p71, %p72
    %p74 = scmp.ne.s32.totalorder %s60, %s61
    %p75 = scmp.eq.s32.totalorder %s15, 1
    %p76 = por %p74, %p75
    %p78 = scmp.ne.s32.totalorder %s61, %s77
    %p79 = scmp.eq.s32.totalorder %s15, 0
    %p80 = por %p78, %p79
    %s81 = ssub.s32 %s17, %s24
    %p82 = scmp.eq.s32.totalorder %s81, 0
    %s84 = sadd.s32 %s83, 1
    %s85 = scalar_select %p82, %s83, %s84
    %p88 = pneg %p82
    %p89 = scmp.eq.s32.totalorder %s9, 1
    %p90 = por %p88, %p89
    %p91 = scmp.ne.s32.totalorder %s83, %s86
    %p92 = scmp.eq.s32.totalorder %s9, 0
    %p93 = por %p91, %p92
    %p94 = scmp.ne.s32.totalorder %s83, %s86
    %p95 = scmp.eq.s32.totalorder %s14, 1
    %p96 = por %p94, %p95
    %p97 = scmp.ne.s32.totalorder %s86, %s87
    %p98 = scmp.eq.s32.totalorder %s14, 0
    %p99 = por %p97, %p98
    %p100 = scmp.ne.s32.totalorder %s86, %s87
    %p101 = scmp.eq.s32.totalorder %s15, 1
    %p102 = por %p100, %p101
    %p104 = scmp.ne.s32.totalorder %s87, %s103
    %p105 = scmp.eq.s32.totalorder %s15, 0
    %p106 = por %p104, %p105
    %s107 = ssub.s32 %s16, %s28
    %s108 = ssub.s32 %s17, %s24
    %s109 = sor.u32 %s107, %s108
    %p110 = scmp.eq.s32.totalorder %s109, 0
    %s112 = sadd.s32 %s111, 1
    %s113 = scalar_select %p110, %s111, %s112
    %p116 = pneg %p110
    %p117 = scmp.eq.s32.totalorder %s9, 1
    %p118 = por %p116, %p117
    %p119 = scmp.ne.s32.totalorder %s111, %s114
    %p120 = scmp.eq.s32.totalorder %s9, 0
    %p121 = por %p119, %p120
    %p122 = scmp.ne.s32.totalorder %s111, %s114
    %p123 = scmp.eq.s32.totalorder %s14, 1
    %p124 = por %p122, %p123
    %p125 = scmp.ne.s32.totalorder %s114, %s115
    %p126 = scmp.eq.s32.totalorder %s14, 0
    %p127 = por %p125, %p126
    %p128 = scmp.ne.s32.totalorder %s114, %s115
    %p129 = scmp.eq.s32.totalorder %s15, 1
    %p130 = por %p128, %p129
    %p132 = scmp.ne.s32.totalorder %s115, %s131
    %p133 = scmp.eq.s32.totalorder %s15, 0
    %p134 = por %p132, %p133
    %p135 = scmp.le.s32.totalorder 1, %s9
    %p136 = scmp.lt.s32.totalorder %s9, 3
    %p137 = pnand %p135, %p136
    %p138 = pneg %p137
    // Predicated region
    $region9: #{downblock_forward.1} parent=5 // pred_check
      _
    $region10: #{downblock_forward.1} parent=5 // pred_check_branch
      %140 = sbr.rel (%p137) target = $region12
    $region11: #{downblock_forward.1} parent=5 // pred_region
      %s141 = ssub.s32 %s9, 1
      // Predicated region
      $region13: #{downblock_forward.1} parent=11 // pred_check
        %p142 = pneg %p73
      $region14: #{downblock_forward.1} parent=11 // pred_check_branch
        %144 = sbr.rel (%p142) target = $region16
      $region15: #{downblock_forward.1} parent=11 // pred_region
        %p145 = scmp.lt.s32.totalorder %s19, 0
        %s146 = scalar_select %p145, %s19, 0
        %s147 = smul.addr %s146, 4
        %s148 = scalar_lea.vmem %s1, %s147
      $region16: #{downblock_forward.1} parent=11 // pred_fallthru
        _
      // Predicated region
      $region17: #{downblock_forward.1} parent=11 // pred_check
        %p149 = pneg %p99
      $region18: #{downblock_forward.1} parent=11 // pred_check_branch
        %151 = sbr.rel (%p149) target = $region20
      $region19: #{downblock_forward.1} parent=11 // pred_region
        %p152 = scmp.lt.s32.totalorder %s19, 0
        %s153 = scalar_select %p152, %s19, 0
        %s154 = smul.addr %s153, 8
        %s155 = scalar_lea.vmem %s2, %s154
      $region20: #{downblock_forward.1} parent=11 // pred_fallthru
        _
    $region12: #{downblock_forward.1} parent=5 // pred_fallthru
      _
    %p156 = scmp.lt.s32.totalorder %s9, 2
    // Predicated region
    $region21: #{downblock_forward.1} parent=5 // pred_check
      %p157 = pneg %p156
    $region22: #{downblock_forward.1} parent=5 // pred_check_branch
      %159 = sbr.rel (%p157) target = $region24
    $region23: #{downblock_forward.1} parent=5 // pred_region
      // Predicated region
      $region25: #{downblock_forward.1} parent=23 // pred_check
        %p160 = pneg %p41
      $region26: #{downblock_forward.1} parent=23 // pred_check_branch
        %162 = sbr.rel (%p160) target = $region28
      $region27: #{downblock_forward.1} parent=23 // pred_region
        %p163 = scmp.lt.s32.totalorder %s16, 1
        %s164 = scalar_select %p163, %s16, 1
        %s165 = smul.addr %s164, 6
        %s166 = smul.addr %s165, 2
        %s167 = scalar_lea.vmem %s0, %s166
      $region28: #{downblock_forward.1} parent=23 // pred_fallthru
        _
    $region24: #{downblock_forward.1} parent=5 // pred_fallthru
      _
    %p168 = scmp.le.s32.totalorder 1, %s9
    %p169 = scmp.lt.s32.totalorder %s9, 3
    %p170 = pnand %p168, %p169
    %p171 = pneg %p170
    // Predicated region
    $region29: #{downblock_forward.1} parent=5 // pred_check
      _
    $region30: #{downblock_forward.1} parent=5 // pred_check_branch
      %173 = sbr.rel (%p170) target = $region32
    $region31: #{downblock_forward.1} parent=5 // pred_region
      %s174 = ssub.s32 %s9, 1
      %p175 = scmp.lt.s32.totalorder %s18, 1
      %s176 = scalar_select %p175, %s18, 1
      %s177 = smul.addr %s176, 6
      %s178 = smul.addr %s177, 2
      %s179 = scalar_lea.vmem %s0, %s178
      %p180 = pneg %p47
      %p181 = pneg %p44
      %p182 = scmp.lt.s32.totalorder %s19, 0
      %s183 = scalar_select %p182, %s19, 0
      %s184 = smul.addr %s183, 4
      %s185 = scalar_lea.vmem %s1, %s184
      %p186 = pneg %p73
      %p187 = pneg %p70
      %p188 = scmp.lt.s32.totalorder %s19, 0
      %s189 = scalar_select %p188, %s19, 0
      %s190 = smul.addr %s189, 8
      %s191 = scalar_lea.vmem %s2, %s190
      %p192 = pneg %p99
      %p193 = pneg %p96
      %p194 = pneg %p127
      %p195 = pneg %p124
      %p196 = scmp.lt.s32.totalorder %s18, 1
      %s197 = scalar_select %p196, %s18, 1
      %p198 = scmp.lt.s32.totalorder %s19, 0
      %s199 = scalar_select %p198, %s19, 0
      %s200 = sadd.s32 %s199, %s197
      %s201 = smul.addr %s200, 8
      %s202 = scalar_lea.vmem %s3, %s201
      %p203 = scmp.lt.s32.totalorder %s18, 1
      %s204 = scalar_select %p203, %s18, 1
      %s205 = smul.addr %s204, 6
      %s206 = smul.addr %s205, 2
      %s207 = scalar_lea.vmem %s0, %s206
      %p208 = scmp.lt.s32.totalorder %s19, 0
      %s209 = scalar_select %p208, %s19, 0
      %s210 = smul.addr %s209, 4
      %s211 = scalar_lea.vmem %s1, %s210
      %p212 = scmp.lt.s32.totalorder %s19, 0
      %s213 = scalar_select %p212, %s19, 0
      %s214 = smul.addr %s213, 8
      %s215 = scalar_lea.vmem %s2, %s214
      %p216 = scmp.lt.s32.totalorder %s18, 1
      %s217 = scalar_select %p216, %s18, 1
      %p218 = scmp.lt.s32.totalorder %s19, 0
      %s219 = scalar_select %p218, %s19, 0
      %s220 = sadd.s32 %s219, %s217
      %s221 = smul.addr %s220, 8
      %s222 = scalar_lea.vmem %s3, %s221
      %v224 = vld [vmem:[%s207] sm:$0x3]
      %v225 = vld [vmem:[%s211] sm:$0xf]
      %s226 = scalar_lea.vmem %s207, 2
      %v227 = vld [vmem:[%s226] sm:$0x3]
      %v229 = vunpack.c.l.b16 %v225
      %v230 = vpack.c.b16 %v229, %v229
      %231 = vrot.lane.b32.xlu0 %v230, 124
      %v232 = vpop.permute.xlu0 %231
      %vm233 = vcmask 31744
      %v235 = vsel %vm233, %v232, 0
      %vm237 = vcmask 1041408
      %v239 = vsel %vm237, %v227, 0
      %241 = vmatprep.subr.bf16.mxu0 0
      %242 = vmatpush1.bf16.msra.mxu0 %v239
      %243 = vmatprep.subr.bf16.mxu0 0
      %244 = vmatpush1.bf16.msra.mxu0 0
      %245 = vmatprep.subr.bf16.mxu0 0
      %246 = vmatpush1.bf16.msra.mxu0 0
      %247 = vmatprep.subr.bf16.mxu0 0
      %248 = vmatpush1.bf16.msra.mxu0 0
      %249 = vmatprep.subr.bf16.mxu0 0
      %250 = vmatpush1.bf16.msra.mxu0 0
      %251 = vmatprep.subr.bf16.mxu0 0
      %252 = vmatpush1.bf16.msra.mxu0 0
      %253 = vmatprep.subr.bf16.mxu0 0
      %254 = vmatpush1.bf16.msra.mxu0 0
      %255 = vmatprep.subr.bf16.mxu0 0
      %256 = vmatpush1.bf16.msra.mxu0 0
      %257 = vmatprep.subr.bf16.mxu0 0
      %258 = vmatpush1.bf16.msra.mxu0 0
      %259 = vmatprep.subr.bf16.mxu0 0
      %260 = vmatpush1.bf16.msra.mxu0 0
      %261 = vmatprep.subr.bf16.mxu0 0
      %262 = vmatpush1.bf16.msra.mxu0 0
      %263 = vmatprep.subr.bf16.mxu0 0
      %264 = vmatpush1.bf16.msra.mxu0 0
      %265 = vmatprep.subr.bf16.mxu0 0
      %266 = vmatpush1.bf16.msra.mxu0 0
      %267 = vmatprep.subr.bf16.mxu0 0
      %268 = vmatpush1.bf16.msra.mxu0 0
      %269 = vmatprep.subr.bf16.mxu0 0
      %270 = vmatpush1.bf16.msra.mxu0 0
      %271 = vmatprep.subr.bf16.mxu0 0
      %272 = vmatpush1.bf16.msra.mxu0 0
      %273 = vmatprep.mubr.bf16.mxu0 0
      %274 = vmatmul.mubr.bf16.gmra.mrb[0].mxu0 %v235
      %v275 = vpop.f32.mrb[0].mxu0
      %v276 = vadd.f32 0.0, %v275
      %v277 = vpop.f32.mrb[0].mxu0
      %v278 = vpop.f32.mrb[0].mxu0
      %v279 = vpop.f32.mrb[0].mxu0
      %280 = vdwg.mxu0
      %v282 = vsel %vm233, %v225, 0
      %v285 = vsel %vm237, %v224, 0
      %287 = vmatprep.subr.bf16.mxu0 0
      %288 = vmatpush1.bf16.msra.mxu0 %v285
      %289 = vmatprep.subr.bf16.mxu0 0
      %290 = vmatpush1.bf16.msra.mxu0 0
      %291 = vmatprep.subr.bf16.mxu0 0
      %292 = vmatpush1.bf16.msra.mxu0 0
      %293 = vmatprep.subr.bf16.mxu0 0
      %294 = vmatpush1.bf16.msra.mxu0 0
      %295 = vmatprep.subr.bf16.mxu0 0
      %296 = vmatpush1.bf16.msra.mxu0 0
      %297 = vmatprep.subr.bf16.mxu0 0
      %298 = vmatpush1.bf16.msra.mxu0 0
      %299 = vmatprep.subr.bf16.mxu0 0
      %300 = vmatpush1.bf16.msra.mxu0 0
      %301 = vmatprep.subr.bf16.mxu0 0
      %302 = vmatpush1.bf16.msra.mxu0 0
      %303 = vmatprep.subr.bf16.mxu0 0
      %304 = vmatpush1.bf16.msra.mxu0 0
      %305 = vmatprep.subr.bf16.mxu0 0
      %306 = vmatpush1.bf16.msra.mxu0 0
      %307 = vmatprep.subr.bf16.mxu0 0
      %308 = vmatpush1.bf16.msra.mxu0 0
      %309 = vmatprep.subr.bf16.mxu0 0
      %310 = vmatpush1.bf16.msra.mxu0 0
      %311 = vmatprep.subr.bf16.mxu0 0
      %312 = vmatpush1.bf16.msra.mxu0 0
      %313 = vmatprep.subr.bf16.mxu0 0
      %314 = vmatpush1.bf16.msra.mxu0 0
      %315 = vmatprep.subr.bf16.mxu0 0
      %316 = vmatpush1.bf16.msra.mxu0 0
      %317 = vmatprep.subr.bf16.mxu0 0
      %318 = vmatpush1.bf16.msra.mxu0 0
      %319 = vmatprep.mubr.bf16.mxu0 0
      %320 = vmatmul.mubr.bf16.gmra.mrb[0].mxu0 %v282
      %v321 = vpop.f32.mrb[0].mxu0
      %v322 = vadd.f32 %v276, %v321
      %v323 = vpop.f32.mrb[0].mxu0
      %v324 = vpop.f32.mrb[0].mxu0
      %v325 = vpop.f32.mrb[0].mxu0
      %326 = vdwg.mxu0
      %s327 = scalar_lea.vmem %s207, 4
      %v328 = vld [vmem:[%s327] sm:$0x3]
      %329 = vrot.lane.b32.xlu0 %v230, 120
      %v330 = vpop.permute.xlu0 %329
      %v332 = vsel %vm233, %v330, 0
      %v335 = vsel %vm237, %v328, 0
      %337 = vmatprep.subr.bf16.mxu0 0
      %338 = vmatpush1.bf16.msra.mxu0 %v335
      %339 = vmatprep.subr.bf16.mxu0 0
      %340 = vmatpush1.bf16.msra.mxu0 0
      %341 = vmatprep.subr.bf16.mxu0 0
      %342 = vmatpush1.bf16.msra.mxu0 0
      %343 = vmatprep.subr.bf16.mxu0 0
      %344 = vmatpush1.bf16.msra.mxu0 0
      %345 = vmatprep.subr.bf16.mxu0 0
      %346 = vmatpush1.bf16.msra.mxu0 0
      %347 = vmatprep.subr.bf16.mxu0 0
      %348 = vmatpush1.bf16.msra.mxu0 0
      %349 = vmatprep.subr.bf16.mxu0 0
      %350 = vmatpush1.bf16.msra.mxu0 0
      %351 = vmatprep.subr.bf16.mxu0 0
      %352 = vmatpush1.bf16.msra.mxu0 0
      %353 = vmatprep.subr.bf16.mxu0 0
      %354 = vmatpush1.bf16.msra.mxu0 0
      %355 = vmatprep.subr.bf16.mxu0 0
      %356 = vmatpush1.bf16.msra.mxu0 0
      %357 = vmatprep.subr.bf16.mxu0 0
      %358 = vmatpush1.bf16.msra.mxu0 0
      %359 = vmatprep.subr.bf16.mxu0 0
      %360 = vmatpush1.bf16.msra.mxu0 0
      %361 = vmatprep.subr.bf16.mxu0 0
      %362 = vmatpush1.bf16.msra.mxu0 0
      %363 = vmatprep.subr.bf16.mxu0 0
      %364 = vmatpush1.bf16.msra.mxu0 0
      %365 = vmatprep.subr.bf16.mxu0 0
      %366 = vmatpush1.bf16.msra.mxu0 0
      %367 = vmatprep.subr.bf16.mxu0 0
      %368 = vmatpush1.bf16.msra.mxu0 0
      %369 = vmatprep.mubr.bf16.mxu0 0
      %370 = vmatmul.mubr.bf16.gmra.mrb[0].mxu0 %v332
      %v371 = vpop.f32.mrb[0].mxu0
      %v372 = vadd.f32 0.0, %v371
      %v373 = vpop.f32.mrb[0].mxu0
      %v374 = vpop.f32.mrb[0].mxu0
      %v375 = vpop.f32.mrb[0].mxu0
      %376 = vdwg.mxu0
      %v377 = vadd.f32 %v322, %v372
      %s378 = scalar_lea.vmem %s207, 6
      %v379 = vld [vmem:[%s378] sm:$0x3]
      %380 = vrot.lane.b32.xlu0 %v230, 116
      %v381 = vpop.permute.xlu0 %380
      %v383 = vsel %vm233, %v381, 0
      %v386 = vsel %vm237, %v379, 0
      %388 = vmatprep.subr.bf16.mxu0 0
      %389 = vmatpush1.bf16.msra.mxu0 %v386
      %390 = vmatprep.subr.bf16.mxu0 0
      %391 = vmatpush1.bf16.msra.mxu0 0
      %392 = vmatprep.subr.bf16.mxu0 0
      %393 = vmatpush1.bf16.msra.mxu0 0
      %394 = vmatprep.subr.bf16.mxu0 0
      %395 = vmatpush1.bf16.msra.mxu0 0
      %396 = vmatprep.subr.bf16.mxu0 0
      %397 = vmatpush1.bf16.msra.mxu0 0
      %398 = vmatprep.subr.bf16.mxu0 0
      %399 = vmatpush1.bf16.msra.mxu0 0
      %400 = vmatprep.subr.bf16.mxu0 0
      %401 = vmatpush1.bf16.msra.mxu0 0
      %402 = vmatprep.subr.bf16.mxu0 0
      %403 = vmatpush1.bf16.msra.mxu0 0
      %404 = vmatprep.subr.bf16.mxu0 0
      %405 = vmatpush1.bf16.msra.mxu0 0
      %406 = vmatprep.subr.bf16.mxu0 0
      %407 = vmatpush1.bf16.msra.mxu0 0
      %408 = vmatprep.subr.bf16.mxu0 0
      %409 = vmatpush1.bf16.msra.mxu0 0
      %410 = vmatprep.subr.bf16.mxu0 0
      %411 = vmatpush1.bf16.msra.mxu0 0
      %412 = vmatprep.subr.bf16.mxu0 0
      %413 = vmatpush1.bf16.msra.mxu0 0
      %414 = vmatprep.subr.bf16.mxu0 0
      %415 = vmatpush1.bf16.msra.mxu0 0
      %416 = vmatprep.subr.bf16.mxu0 0
      %417 = vmatpush1.bf16.msra.mxu0 0
      %418 = vmatprep.subr.bf16.mxu0 0
      %419 = vmatpush1.bf16.msra.mxu0 0
      %420 = vmatprep.mubr.bf16.mxu0 0
      %421 = vmatmul.mubr.bf16.gmra.mrb[0].mxu0 %v383
      %v422 = vpop.f32.mrb[0].mxu0
      %v423 = vadd.f32 0.0, %v422
      %v424 = vpop.f32.mrb[0].mxu0
      %v425 = vpop.f32.mrb[0].mxu0
      %v426 = vpop.f32.mrb[0].mxu0
      %427 = vdwg.mxu0
      %v428 = vadd.f32 %v377, %v423
      %s429 = scalar_lea.vmem %s207, 8
      %v430 = vld [vmem:[%s429] sm:$0x3]
      %431 = vrot.lane.b32.xlu0 %v230, 112
      %v432 = vpop.permute.xlu0 %431
      %v434 = vsel %vm233, %v432, 0
      %v437 = vsel %vm237, %v430, 0
      %439 = vmatprep.subr.bf16.mxu0 0
      %440 = vmatpush1.bf16.msra.mxu0 %v437
      %441 = vmatprep.subr.bf16.mxu0 0
      %442 = vmatpush1.bf16.msra.mxu0 0
      %443 = vmatprep.subr.bf16.mxu0 0
      %444 = vmatpush1.bf16.msra.mxu0 0
      %445 = vmatprep.subr.bf16.mxu0 0
      %446 = vmatpush1.bf16.msra.mxu0 0
      %447 = vmatprep.subr.bf16.mxu0 0
      %448 = vmatpush1.bf16.msra.mxu0 0
      %449 = vmatprep.subr.bf16.mxu0 0
      %450 = vmatpush1.bf16.msra.mxu0 0
      %451 = vmatprep.subr.bf16.mxu0 0
      %452 = vmatpush1.bf16.msra.mxu0 0
      %453 = vmatprep.subr.bf16.mxu0 0
      %454 = vmatpush1.bf16.msra.mxu0 0
      %455 = vmatprep.subr.bf16.mxu0 0
      %456 = vmatpush1.bf16.msra.mxu0 0
      %457 = vmatprep.subr.bf16.mxu0 0
      %458 = vmatpush1.bf16.msra.mxu0 0
      %459 = vmatprep.subr.bf16.mxu0 0
      %460 = vmatpush1.bf16.msra.mxu0 0
      %461 = vmatprep.subr.bf16.mxu0 0
      %462 = vmatpush1.bf16.msra.mxu0 0
      %463 = vmatprep.subr.bf16.mxu0 0
      %464 = vmatpush1.bf16.msra.mxu0 0
      %465 = vmatprep.subr.bf16.mxu0 0
      %466 = vmatpush1.bf16.msra.mxu0 0
      %467 = vmatprep.subr.bf16.mxu0 0
      %468 = vmatpush1.bf16.msra.mxu0 0
      %469 = vmatprep.subr.bf16.mxu0 0
      %470 = vmatpush1.bf16.msra.mxu0 0
      %471 = vmatprep.mubr.bf16.mxu0 0
      %472 = vmatmul.mubr.bf16.gmra.mrb[0].mxu0 %v434
      %v473 = vpop.f32.mrb[0].mxu0
      %v474 = vadd.f32 0.0, %v473
      %v475 = vpop.f32.mrb[0].mxu0
      %v476 = vpop.f32.mrb[0].mxu0
      %v477 = vpop.f32.mrb[0].mxu0
      %478 = vdwg.mxu0
      %v479 = vadd.f32 %v428, %v474
      %s480 = scalar_lea.vmem %s207, 10
      %v481 = vld [vmem:[%s480] sm:$0x3]
      %482 = vrot.lane.b32.xlu0 %v230, 108
      %v483 = vpop.permute.xlu0 %482
      %v485 = vsel %vm233, %v483, 0
      %v488 = vsel %vm237, %v481, 0
      %490 = vmatprep.subr.bf16.mxu0 0
      %491 = vmatpush1.bf16.msra.mxu0 %v488
      %492 = vmatprep.subr.bf16.mxu0 0
      %493 = vmatpush1.bf16.msra.mxu0 0
      %494 = vmatprep.subr.bf16.mxu0 0
      %495 = vmatpush1.bf16.msra.mxu0 0
      %496 = vmatprep.subr.bf16.mxu0 0
      %497 = vmatpush1.bf16.msra.mxu0 0
      %498 = vmatprep.subr.bf16.mxu0 0
      %499 = vmatpush1.bf16.msra.mxu0 0
      %500 = vmatprep.subr.bf16.mxu0 0
      %501 = vmatpush1.bf16.msra.mxu0 0
      %502 = vmatprep.subr.bf16.mxu0 0
      %503 = vmatpush1.bf16.msra.mxu0 0
      %504 = vmatprep.subr.bf16.mxu0 0
      %505 = vmatpush1.bf16.msra.mxu0 0
      %506 = vmatprep.subr.bf16.mxu0 0
      %507 = vmatpush1.bf16.msra.mxu0 0
      %508 = vmatprep.subr.bf16.mxu0 0
      %509 = vmatpush1.bf16.msra.mxu0 0
      %510 = vmatprep.subr.bf16.mxu0 0
      %511 = vmatpush1.bf16.msra.mxu0 0
      %512 = vmatprep.subr.bf16.mxu0 0
      %513 = vmatpush1.bf16.msra.mxu0 0
      %514 = vmatprep.subr.bf16.mxu0 0
      %515 = vmatpush1.bf16.msra.mxu0 0
      %516 = vmatprep.subr.bf16.mxu0 0
      %517 = vmatpush1.bf16.msra.mxu0 0
      %518 = vmatprep.subr.bf16.mxu0 0
      %519 = vmatpush1.bf16.msra.mxu0 0
      %520 = vmatprep.subr.bf16.mxu0 0
      %521 = vmatpush1.bf16.msra.mxu0 0
      %522 = vmatprep.mubr.bf16.mxu0 0
      %523 = vmatmul.mubr.bf16.gmra.mrb[0].mxu0 %v485
      %v524 = vpop.f32.mrb[0].mxu0
      %v525 = vadd.f32 0.0, %v524
      %v526 = vpop.f32.mrb[0].mxu0
      %v527 = vpop.f32.mrb[0].mxu0
      %v528 = vpop.f32.mrb[0].mxu0
      %529 = vdwg.mxu0
      %v530 = vadd.f32 %v479, %v525
      %531 = vrot.lane.b32.xlu0 %v230, 104
      %v532 = vpop.permute.xlu0 %531
      %v535 = vunpack.c.l.s4 1983009808
      %v536 = vunpack.c.0.s8 %v535
      %v537 = vlaneseq
      %v538 = vshrl.u32 %v537, 7
      %v539 = vsub.s32 %v536, %v538
      %v540 = vrot.slane %v224, %v539
      %541 = vrot.lane.b32.xlu0 %v540, 120
      %v542 = vpop.permute.xlu0 %541
      %v544 = vsel %vm233, %v532, 0
      %v547 = vsel %vm237, %v542, 0
      %549 = vmatprep.subr.bf16.mxu0 0
      %550 = vmatpush1.bf16.msra.mxu0 %v547
      %551 = vmatprep.subr.bf16.mxu0 0
      %552 = vmatpush1.bf16.msra.mxu0 0
      %553 = vmatprep.subr.bf16.mxu0 0
      %554 = vmatpush1.bf16.msra.mxu0 0
      %555 = vmatprep.subr.bf16.mxu0 0
      %556 = vmatpush1.bf16.msra.mxu0 0
      %557 = vmatprep.subr.bf16.mxu0 0
      %558 = vmatpush1.bf16.msra.mxu0 0
      %559 = vmatprep.subr.bf16.mxu0 0
      %560 = vmatpush1.bf16.msra.mxu0 0
      %561 = vmatprep.subr.bf16.mxu0 0
      %562 = vmatpush1.bf16.msra.mxu0 0
      %563 = vmatprep.subr.bf16.mxu0 0
      %564 = vmatpush1.bf16.msra.mxu0 0
      %565 = vmatprep.subr.bf16.mxu0 0
      %566 = vmatpush1.bf16.msra.mxu0 0
      %567 = vmatprep.subr.bf16.mxu0 0
      %568 = vmatpush1.bf16.msra.mxu0 0
      %569 = vmatprep.subr.bf16.mxu0 0
      %570 = vmatpush1.bf16.msra.mxu0 0
      %571 = vmatprep.subr.bf16.mxu0 0
      %572 = vmatpush1.bf16.msra.mxu0 0
      %573 = vmatprep.subr.bf16.mxu0 0
      %574 = vmatpush1.bf16.msra.mxu0 0
      %575 = vmatprep.subr.bf16.mxu0 0
      %576 = vmatpush1.bf16.msra.mxu0 0
      %577 = vmatprep.subr.bf16.mxu0 0
      %578 = vmatpush1.bf16.msra.mxu0 0
      %579 = vmatprep.subr.bf16.mxu0 0
      %580 = vmatpush1.bf16.msra.mxu0 0
      %581 = vmatprep.mubr.bf16.mxu0 0
      %582 = vmatmul.mubr.bf16.gmra.mrb[0].mxu0 %v544
      %v583 = vpop.f32.mrb[0].mxu0
      %v584 = vadd.f32 0.0, %v583
      %v585 = vpop.f32.mrb[0].mxu0
      %v586 = vpop.f32.mrb[0].mxu0
      %v587 = vpop.f32.mrb[0].mxu0
      %588 = vdwg.mxu0
      %v589 = vadd.f32 %v530, %v584
      %v590 = vld [vmem:[%s226] sm:$0x3]
      %v591 = vld [vmem:[%s211] sm:$0xf]
      %v593 = vunpack.c.l.b16 %v591
      %v594 = vpack.c.b16 %v593, %v593
      %595 = vrot.lane.b32.xlu0 %v594, 100
      %v596 = vpop.permute.xlu0 %595
      %v599 = vunpack.c.l.s4 1983009808
      %v600 = vunpack.c.0.s8 %v599
      %v601 = vlaneseq
      %v602 = vshrl.u32 %v601, 7
      %v603 = vsub.s32 %v600, %v602
      %v604 = vrot.slane %v590, %v603
      %605 = vrot.lane.b32.xlu0 %v604, 120
      %v606 = vpop.permute.xlu0 %605
      %v608 = vsel %vm233, %v596, 0
      %v611 = vsel %vm237, %v606, 0
      %613 = vmatprep.subr.bf16.mxu0 0
      %614 = vmatpush1.bf16.msra.mxu0 %v611
      %615 = vmatprep.subr.bf16.mxu0 0
      %616 = vmatpush1.bf16.msra.mxu0 0
      %617 = vmatprep.subr.bf16.mxu0 0
      %618 = vmatpush1.bf16.msra.mxu0 0
      %619 = vmatprep.subr.bf16.mxu0 0
      %620 = vmatpush1.bf16.msra.mxu0 0
      %621 = vmatprep.subr.bf16.mxu0 0
      %622 = vmatpush1.bf16.msra.mxu0 0
      %623 = vmatprep.subr.bf16.mxu0 0
      %624 = vmatpush1.bf16.msra.mxu0 0
      %625 = vmatprep.subr.bf16.mxu0 0
      %626 = vmatpush1.bf16.msra.mxu0 0
      %627 = vmatprep.subr.bf16.mxu0 0
      %628 = vmatpush1.bf16.msra.mxu0 0
      %629 = vmatprep.subr.bf16.mxu0 0
      %630 = vmatpush1.bf16.msra.mxu0 0
      %631 = vmatprep.subr.bf16.mxu0 0
      %632 = vmatpush1.bf16.msra.mxu0 0
      %633 = vmatprep.subr.bf16.mxu0 0
      %634 = vmatpush1.bf16.msra.mxu0 0
      %635 = vmatprep.subr.bf16.mxu0 0
      %636 = vmatpush1.bf16.msra.mxu0 0
      %637 = vmatprep.subr.bf16.mxu0 0
      %638 = vmatpush1.bf16.msra.mxu0 0
      %639 = vmatprep.subr.bf16.mxu0 0
      %640 = vmatpush1.bf16.msra.mxu0 0
      %641 = vmatprep.subr.bf16.mxu0 0
      %642 = vmatpush1.bf16.msra.mxu0 0
      %643 = vmatprep.subr.bf16.mxu0 0
      %644 = vmatpush1.bf16.msra.mxu0 0
      %645 = vmatprep.mubr.bf16.mxu0 0
      %646 = vmatmul.mubr.bf16.gmra.mrb[0].mxu0 %v608
      %v647 = vpop.f32.mrb[0].mxu0
      %v648 = vadd.f32 0.0, %v647
      %v649 = vpop.f32.mrb[0].mxu0
      %v650 = vpop.f32.mrb[0].mxu0
      %v651 = vpop.f32.mrb[0].mxu0
      %652 = vdwg.mxu0
      %v653 = vadd.f32 %v589, %v648
      %v654 = vld [vmem:[%s327] sm:$0x3]
      %v655 = vld [vmem:[%s211] sm:$0xf]
      %v657 = vunpack.c.l.b16 %v655
      %v658 = vpack.c.b16 %v657, %v657
      %659 = vrot.lane.b32.xlu0 %v658, 96
      %v660 = vpop.permute.xlu0 %659
      %v663 = vunpack.c.l.s4 1983009808
      %v664 = vunpack.c.0.s8 %v663
      %v665 = vlaneseq
      %v666 = vshrl.u32 %v665, 7
      %v667 = vsub.s32 %v664, %v666
      %v668 = vrot.slane %v654, %v667
      %669 = vrot.lane.b32.xlu0 %v668, 120
      %v670 = vpop.permute.xlu0 %669
      %v672 = vsel %vm233, %v660, 0
      %v675 = vsel %vm237, %v670, 0
      %677 = vmatprep.subr.bf16.mxu0 0
      %678 = vmatpush1.bf16.msra.mxu0 %v675
      %679 = vmatprep.subr.bf16.mxu0 0
      %680 = vmatpush1.bf16.msra.mxu0 0
      %681 = vmatprep.subr.bf16.mxu0 0
      %682 = vmatpush1.bf16.msra.mxu0 0
      %683 = vmatprep.subr.bf16.mxu0 0
      %684 = vmatpush1.bf16.msra.mxu0 0
      %685 = vmatprep.subr.bf16.mxu0 0
      %686 = vmatpush1.bf16.msra.mxu0 0
      %687 = vmatprep.subr.bf16.mxu0 0
      %688 = vmatpush1.bf16.msra.mxu0 0
      %689 = vmatprep.subr.bf16.mxu0 0
      %690 = vmatpush1.bf16.msra.mxu0 0
      %691 = vmatprep.subr.bf16.mxu0 0
      %692 = vmatpush1.bf16.msra.mxu0 0
      %693 = vmatprep.subr.bf16.mxu0 0
      %694 = vmatpush1.bf16.msra.mxu0 0
      %695 = vmatprep.subr.bf16.mxu0 0
      %696 = vmatpush1.bf16.msra.mxu0 0
      %697 = vmatprep.subr.bf16.mxu0 0
      %698 = vmatpush1.bf16.msra.mxu0 0
      %699 = vmatprep.subr.bf16.mxu0 0
      %700 = vmatpush1.bf16.msra.mxu0 0
      %701 = vmatprep.subr.bf16.mxu0 0
      %702 = vmatpush1.bf16.msra.mxu0 0
      %703 = vmatprep.subr.bf16.mxu0 0
      %704 = vmatpush1.bf16.msra.mxu0 0
      %705 = vmatprep.subr.bf16.mxu0 0
      %706 = vmatpush1.bf16.msra.mxu0 0
      %707 = vmatprep.subr.bf16.mxu0 0
      %708 = vmatpush1.bf16.msra.mxu0 0
      %709 = vmatprep.mubr.bf16.mxu0 0
      %710 = vmatmul.mubr.bf16.gmra.mrb[0].mxu0 %v672
      %v711 = vpop.f32.mrb[0].mxu0
      %v712 = vadd.f32 0.0, %v711
      %v713 = vpop.f32.mrb[0].mxu0
      %v714 = vpop.f32.mrb[0].mxu0
      %v715 = vpop.f32.mrb[0].mxu0
      %716 = vdwg.mxu0
      %v717 = vadd.f32 %v653, %v712
      %v718 = vld [vmem:[%s215] sm:$0xff]
      %720 = vset.pattern.permute.xlu0 0
      %721 = vperm.xlu0 %720, %v718
      %v722 = vpop.permute.xlu0 %721
      %v724 = vadd.f32 %v717, %v722
      %vm725 = vcmp.gt.f32.partialorder %v724, 0.0
      %v726 = vmul.f32 %v724, 1.442695
      %v727 = vpow.pop %v726
      %v728 = vsub.f32 %v727, 1.0
      %v729 = vsel %vm725, %v724, %v728
      %vm730 = vcmask 523264
      %731 = vst.msk [vmem:[%s222] sm:$0xff] %vm730, %v729
      %p732 = scmp.lt.s32.totalorder %s18, 1
      %s733 = scalar_select %p732, %s18, 1
      %p734 = scmp.lt.s32.totalorder %s19, 0
      %s735 = scalar_select %p734, %s19, 0
      %s736 = sadd.s32 %s735, %s733
      %s737 = smul.addr %s736, 8
      %s738 = scalar_lea.vmem %s3, %s737
      // Predicated region
      $region33: #{downblock_forward.1} parent=31 // pred_check
        %p739 = pneg %p124
      $region34: #{downblock_forward.1} parent=31 // pred_check_branch
        %741 = sbr.rel (%p739) target = $region36
      $region35: #{downblock_forward.1} parent=31 // pred_region
        _
      $region36: #{downblock_forward.1} parent=31 // pred_fallthru
        _
    $region32: #{downblock_forward.1} parent=5 // pred_fallthru
      _
    %p742 = scmp.le.s32.totalorder 2, %s9
    // Predicated region
    $region37: #{downblock_forward.1} parent=5 // pred_check
      %p743 = pneg %p742
    $region38: #{downblock_forward.1} parent=5 // pred_check_branch
      %745 = sbr.rel (%p743) target = $region40
    $region39: #{downblock_forward.1} parent=5 // pred_region
      %s746 = ssub.s32 %s9, 2
      // Predicated region
      $region41: #{downblock_forward.1} parent=39 // pred_check
        %p747 = pneg %p130
      $region42: #{downblock_forward.1} parent=39 // pred_check_branch
        %749 = sbr.rel (%p747) target = $region44
      $region43: #{downblock_forward.1} parent=39 // pred_region
        %p750 = scmp.lt.s32.totalorder %s20, 1
        %s751 = scalar_select %p750, %s20, 1
        %p752 = scmp.lt.s32.totalorder %s21, 0
        %s753 = scalar_select %p752, %s21, 0
        %s754 = sadd.s32 %s753, %s751
        %s755 = smul.addr %s754, 8
        %s756 = scalar_lea.vmem %s3, %s755
      $region44: #{downblock_forward.1} parent=39 // pred_fallthru
        _
    $region40: #{downblock_forward.1} parent=5 // pred_fallthru
      _
  $region6: #{downblock_forward.1} parent=0 // loop_footer
    %s13 = sadd.s32 1, %s9
  $region7: #{downblock_forward.1} parent=0 // loop_footer_branch
    %8 = sbr.rel target = $region3
  $region8: #{downblock_forward.1} parent=0 // loop_exit
    _

</llo_original>
